<compile_context>
chip_gen: v6e
topology: v6e:2x2x1
jax: 0.10.0
libtpu: 0.0.40
codegen_flags: <defaults>
</compile_context>

<pallas_src>
import jax
import jax.numpy as jnp
import numpy as np
from jax.experimental import pallas as pl
from jax.experimental.pallas import tpu as pltpu

_LANE = 128
_SUBLANE = 8
# Conservative working-set budget used to cap the batch tile: v7x has 64 MiB
# physical VMEM / 32 MiB scoped default; v5e/v6e have more headroom.
_VMEM_BUDGET = 28 * 2 ** 20


def _round_up(n, m):
    return ((n + m - 1) // m) * m


# ----------------------------------------------------------------------------
# Kernel
# ----------------------------------------------------------------------------
def _make_nbeats_generic_kernel(num_block_layers):
    """Kernel closed over the (static) number of FC-stack layers."""

    def kernel(*refs):
        x_ref = refs[0]
        bc_ref, fc_ref = refs[-2], refs[-1]

        # Activations stay in f32 vregs; only MXU operands are bf16.
        h = x_ref[...].astype(jnp.float32)

        idx = 1
        for _ in range(num_block_layers):              # unrolled fc_stack
            w = refs[idx][...]                          # (in, W_pad)  bf16
            b = refs[idx + 1][...]                      # (1,  W_pad)  f32
            idx += 2
            h = jnp.maximum(
                jnp.dot(h.astype(jnp.bfloat16), w,
                        preferred_element_type=jnp.float32) + b,
                0.0)

        w_theta = refs[idx][...]                        # (W_pad, 2E_pad) bf16
        w_bc = refs[idx + 1][...]                       # (2E_pad, C)     bf16
        b_bc = refs[idx + 2][...]                       # (1, C)          f32
        w_fc = refs[idx + 3][...]                       # (2E_pad, P)     bf16
        b_fc = refs[idx + 4][...]                       # (1, P)          f32

        # Fused theta projection: [theta_b | theta_f] in one MXU push + ReLU.
        theta = jnp.maximum(
            jnp.dot(h.astype(jnp.bfloat16), w_theta,
                    preferred_element_type=jnp.float32),
            0.0).astype(jnp.bfloat16)

        # Backcast / forecast written straight to their exact-shape outputs;
        # the zero-extended weights make both results start at lane 0, so no
        # slicing / lane rotation is needed.
        bc_ref[...] = (jnp.dot(theta, w_bc, preferred_element_type=jnp.float32)
                       + b_bc).astype(bc_ref.dtype)
        fc_ref[...] = (jnp.dot(theta, w_fc, preferred_element_type=jnp.float32)
                       + b_fc).astype(fc_ref.dtype)

    return kernel


# ----------------------------------------------------------------------------
# One-time parameter packing (hoisted out of the per-call path)
# ----------------------------------------------------------------------------
def pack_nbeats_generic_params(params):
    """Pack module params into kernel operands. Call ONCE and reuse.

      * fc_stack weights zero-padded so every hidden dim is a multiple of 128
        (lane-dense h), cast to bf16; biases zero-padded, kept f32.
      * theta_b / theta_f fused into one (W_pad, 2E_pad) bf16 weight.
      * backcast / forecast weights zero-extended along the theta axis so each
        consumes the full fused theta (block structure); outputs keep their
        exact sizes (C and P).  All padding is exact zeros -> math unchanged.
    """
    fc_stack = params["fc_stack"]
    width = fc_stack[0][0].shape[1]
    w_pad = _round_up(width, _LANE)

    flat = []
    in_dim = fc_stack[0][0].shape[0]          # context_length (x is not padded)
    for w, b in fc_stack:
        wi = jnp.zeros((in_dim, w_pad), jnp.float32)
        wi = wi.at[:w.shape[0], :w.shape[1]].set(w)
        bi = jnp.zeros((1, w_pad), jnp.float32).at[:, :b.shape[1]].set(b)
        flat.extend([wi.astype(jnp.bfloat16), bi])
        in_dim = w_pad

    w_tb = params["theta_b_fc"]               # (width, E)
    w_tf = params["theta_f_fc"]               # (width, E)
    e = w_tb.shape[1]
    te_pad = _round_up(2 * e, _LANE)
    w_theta = jnp.zeros((w_pad, te_pad), jnp.float32)
    w_theta = w_theta.at[:width, :e].set(w_tb)
    w_theta = w_theta.at[:width, e:2 * e].set(w_tf)
    flat.append(w_theta.astype(jnp.bfloat16))

    w_bc, b_bc = params["backcast_fc"]        # (E, C), (1, C)
    w_fc, b_fc = params["forecast_fc"]        # (E, P), (1, P)
    w_bc_p = jnp.zeros((te_pad, w_bc.shape[1]), jnp.float32).at[:e, :].set(w_bc)
    w_fc_p = jnp.zeros((te_pad, w_fc.shape[1]), jnp.float32).at[e:2 * e, :].set(w_fc)
    flat.extend([w_bc_p.astype(jnp.bfloat16), b_bc.astype(jnp.float32),
                 w_fc_p.astype(jnp.bfloat16), b_fc.astype(jnp.float32)])
    return tuple(flat)


# ----------------------------------------------------------------------------
# Batch tiling
# ----------------------------------------------------------------------------
def _choose_batch_tiling(batch, per_row_bytes, resident_bytes, cap_rows=1024):
    """Pick (block_b, batch_grid).

    block_b is a multiple of 8, fits a v7x-safe VMEM budget, yields >= 2 grid
    steps whenever the batch allows it (both v7x TensorCores get work), and is
    derived so the padded batch is a multiple of block_b (no jnp.pad of x for
    tile-aligned batches).
    """
    batch8 = _round_up(batch, _SUBLANE)
    avail = max(_VMEM_BUDGET - 2 * resident_bytes, _VMEM_BUDGET // 4)
    fit = max(_SUBLANE,
              (avail // max(per_row_bytes, 1)) // _SUBLANE * _SUBLANE)
    cap = max(_SUBLANE, min(cap_rows, fit))
    n_steps = pl.cdiv(batch8, cap)
    if batch8 >= 2 * _SUBLANE:
        n_steps = max(n_steps, 2)
    block_b = _round_up(pl.cdiv(batch8, n_steps), _SUBLANE)
    return block_b, _round_up(batch8, block_b)


# ----------------------------------------------------------------------------
# Forward wrapper
# ----------------------------------------------------------------------------
def nbeats_generic_block(x, packed, *, block_b=None):
    """Forward: x (batch, context_length) -> (backcast, forecast)."""
    batch, context_length = x.shape
    num_block_layers = (len(packed) - 5) // 2
    w_pad = packed[0].shape[1]
    te_pad = packed[-4].shape[0]
    prediction_length = packed[-2].shape[1]
    out_dtype = x.dtype

    resident_bytes = sum(int(np.prod(a.shape)) * a.dtype.itemsize
                         for a in packed)
    # Rough per-row working set: double-buffered x, two double-buffered
    # outputs, and live f32/bf16 intermediates (h, theta, casts).
    per_row = (2 * context_length * x.dtype.itemsize
               + 2 * (context_length + prediction_length)
               * jnp.dtype(out_dtype).itemsize
               + 6 * max(w_pad, te_pad, context_length) * 4)

    if block_b is None:
        block_b, batch_grid = _choose_batch_tiling(batch, per_row,
                                                   resident_bytes)
    else:
        block_b = _round_up(block_b, _SUBLANE)
        batch_grid = _round_up(_round_up(batch, _SUBLANE), block_b)

    if batch_grid != batch:
        # Only hit when batch is not a multiple of the chosen tile.
        x = jnp.pad(x, ((0, batch_grid - batch), (0, 0)))

    grid = (batch_grid // block_b,)

    def resident(a):
        # Same block index every grid step -> DMA'd once, stays in VMEM.
        return pl.BlockSpec(a.shape, lambda i: (0, 0))

    in_specs = [pl.BlockSpec((block_b, context_length), lambda i: (i, 0))]
    in_specs += [resident(a) for a in packed]
    out_specs = (pl.BlockSpec((block_b, context_length), lambda i: (i, 0)),
                 pl.BlockSpec((block_b, prediction_length), lambda i: (i, 0)))
    out_shape = (jax.ShapeDtypeStruct((batch_grid, context_length), out_dtype),
                 jax.ShapeDtypeStruct((batch_grid, prediction_length),
                                      out_dtype))

    vmem_limit = int(min(48 * 2 ** 20,
                         max(32 * 2 ** 20,
                             2 * resident_bytes + 2 * block_b * per_row)))

    backcast, forecast = pl.pallas_call(
        _make_nbeats_generic_kernel(num_block_layers),
        grid=grid,
        in_specs=in_specs,
        out_specs=out_specs,
        out_shape=out_shape,
        compiler_params=pltpu.CompilerParams(
            dimension_semantics=("parallel",),
            vmem_limit_bytes=vmem_limit),
    )(x, *packed)

    if batch_grid != batch:
        backcast = backcast[:batch]
        forecast = forecast[:batch]
    return backcast, forecast


# ----------------------------------------------------------------------------
# Deterministic init + references
# ----------------------------------------------------------------------------
def _linear_params(key, in_f, out_f, bias=True):
    """PyTorch-like init; weight returned already as (in, out)."""
    kw, kb = jax.random.split(key)
    bound = 1.0 / float(np.sqrt(in_f))
    w = jax.random.uniform(kw, (in_f, out_f), jnp.float32, -bound, bound)
    if bias:
        b = jax.random.uniform(kb, (1, out_f), jnp.float32, -bound, bound)
        return w, b
    return w


def init_params(key, *, width, num_block_layers, expansion_coefficient_length,
                prediction_length, context_length):
    keys = jax.random.split(key, num_block_layers + 4)
    fc_stack = [_linear_params(keys[0], context_length, width)]
    for i in range(num_block_layers - 1):
        fc_stack.append(_linear_params(keys[1 + i], width, width))
    theta_b_fc = _linear_params(keys[num_block_layers], width,
                                expansion_coefficient_length, bias=False)
    theta_f_fc = _linear_params(keys[num_block_layers + 1], width,
                                expansion_coefficient_length, bias=False)
    backcast_fc = _linear_params(keys[num_block_layers + 2],
                                 expansion_coefficient_length, context_length)
    forecast_fc = _linear_params(keys[num_block_layers + 3],
                                 expansion_coefficient_length, prediction_length)
    return dict(fc_stack=fc_stack, theta_b_fc=theta_b_fc, theta_f_fc=theta_f_fc,
                backcast_fc=backcast_fc, forecast_fc=forecast_fc)


def reference_forward(x, params):
    """Pure-JAX f32 reference mirroring the PyTorch forward."""
    h = x
    for w, b in params["fc_stack"]:
        h = jnp.maximum(h @ w + b, 0.0)
    theta_b = jnp.maximum(h @ params["theta_b_fc"], 0.0)
    theta_f = jnp.maximum(h @ params["theta_f_fc"], 0.0)
    wbc, bbc = params["backcast_fc"]
    wfc, bfc = params["forecast_fc"]
    return theta_b @ wbc + bbc, theta_f @ wfc + bfc


def reference_forward_mixed(x, params):
    """Same bf16-to-MXU / f32-accumulate discipline as the kernel."""
    def mdot(a, w):
        return jnp.dot(a.astype(jnp.bfloat16), w.astype(jnp.bfloat16),
                       preferred_element_type=jnp.float32)
    h = x
    for w, b in params["fc_stack"]:
        h = jnp.maximum(mdot(h, w) + b, 0.0)
    theta_b = jnp.maximum(mdot(h, params["theta_b_fc"]), 0.0)
    theta_f = jnp.maximum(mdot(h, params["theta_f_fc"]), 0.0)
    wbc, bbc = params["backcast_fc"]
    wfc, bfc = params["forecast_fc"]
    return mdot(theta_b, wbc) + bbc, mdot(theta_f, wfc) + bfc


if __name__ == "__main__":
    batch = 64
    context_length = 32
    prediction_length = 8
    width = 64
    num_block_layers = 3
    expansion_coefficient_length = 16

    key = jax.random.PRNGKey(0)
    kx, kp = jax.random.split(key)
    x = jax.random.normal(kx, (batch, context_length), jnp.float32)
    params = init_params(
        kp,
        width=width,
        num_block_layers=num_block_layers,
        expansion_coefficient_length=expansion_coefficient_length,
        prediction_length=prediction_length,
        context_length=context_length,
    )

    # Pack ONCE (hoisted out of the per-call path), then jit the forward.
    packed = pack_nbeats_generic_params(params)
    fwd = jax.jit(nbeats_generic_block)

    backcast, forecast = fwd(x, packed)
    jax.block_until_ready((backcast, forecast))

    # Exactness vs. a pure-JAX reference using the same mixed precision.
    mix_back, mix_fore = reference_forward_mixed(x, params)
    np.testing.assert_allclose(np.asarray(backcast), np.asarray(mix_back),
                               rtol=1e-3, atol=1e-3)
    np.testing.assert_allclose(np.asarray(forecast), np.asarray(mix_fore),
                               rtol=1e-3, atol=1e-3)

    # Semantic check vs. the full-f32 PyTorch-equivalent reference
    # (bf16 MXU inputs => relaxed tolerance).
    ref_back, ref_fore = reference_forward(x, params)
    np.testing.assert_allclose(np.asarray(backcast), np.asarray(ref_back),
                               rtol=2e-2, atol=2e-2)
    np.testing.assert_allclose(np.asarray(forecast), np.asarray(ref_fore),
                               rtol=2e-2, atol=2e-2)

    assert backcast.shape == (batch, context_length)
    assert forecast.shape == (batch, prediction_length)
    print("KERNEL_OK")
</pallas_src>

<mosaic_0001>
module attributes {stable_mosaic.version = 11 : i64} {
  func.func @kernel(%arg0: i32, %arg1: memref<32x32xf32, #tpu.memory_space<vmem>>, %arg2: memref<32x128xbf16, #tpu.memory_space<vmem>>, %arg3: memref<1x128xf32, #tpu.memory_space<vmem>>, %arg4: memref<128x128xbf16, #tpu.memory_space<vmem>>, %arg5: memref<1x128xf32, #tpu.memory_space<vmem>>, %arg6: memref<128x128xbf16, #tpu.memory_space<vmem>>, %arg7: memref<1x128xf32, #tpu.memory_space<vmem>>, %arg8: memref<128x128xbf16, #tpu.memory_space<vmem>>, %arg9: memref<128x32xbf16, #tpu.memory_space<vmem>>, %arg10: memref<1x32xf32, #tpu.memory_space<vmem>>, %arg11: memref<128x8xbf16, #tpu.memory_space<vmem>>, %arg12: memref<1x8xf32, #tpu.memory_space<vmem>>, %arg13: memref<32x32xf32, #tpu.memory_space<vmem>>, %arg14: memref<32x8xf32, #tpu.memory_space<vmem>>) attributes {dimension_semantics = [#tpu.dimension_semantics<parallel>], iteration_bounds = array<i64: 2>, scalar_prefetch = 0 : i64, scratch_operands = 0 : i64, tpu.core_type = #tpu.core_type<tc>, window_params = [{transform_indices = @transform_0, window_bounds = array<i64: 32, 32>}, {pipeline_mode = #tpu.pipeline_mode<synchronous>, transform_indices = @transform_1, window_bounds = array<i64: 32, 128>}, {pipeline_mode = #tpu.pipeline_mode<synchronous>, transform_indices = @transform_2, window_bounds = array<i64: 1, 128>}, {pipeline_mode = #tpu.pipeline_mode<synchronous>, transform_indices = @transform_3, window_bounds = array<i64: 128, 128>}, {pipeline_mode = #tpu.pipeline_mode<synchronous>, transform_indices = @transform_4, window_bounds = array<i64: 1, 128>}, {pipeline_mode = #tpu.pipeline_mode<synchronous>, transform_indices = @transform_5, window_bounds = array<i64: 128, 128>}, {pipeline_mode = #tpu.pipeline_mode<synchronous>, transform_indices = @transform_6, window_bounds = array<i64: 1, 128>}, {pipeline_mode = #tpu.pipeline_mode<synchronous>, transform_indices = @transform_7, window_bounds = array<i64: 128, 128>}, {pipeline_mode = #tpu.pipeline_mode<synchronous>, transform_indices = @transform_8, window_bounds = array<i64: 128, 32>}, {pipeline_mode = #tpu.pipeline_mode<synchronous>, transform_indices = @transform_9, window_bounds = array<i64: 1, 32>}, {pipeline_mode = #tpu.pipeline_mode<synchronous>, transform_indices = @transform_10, window_bounds = array<i64: 128, 8>}, {pipeline_mode = #tpu.pipeline_mode<synchronous>, transform_indices = @transform_11, window_bounds = array<i64: 1, 8>}, {transform_indices = @transform_12, window_bounds = array<i64: 32, 32>}, {transform_indices = @transform_13, window_bounds = array<i64: 32, 8>}]} {
    %c0 = arith.constant 0 : index
    %c0_0 = arith.constant 0 : index
    %0 = vector.load %arg1[%c0, %c0_0] : memref<32x32xf32, #tpu.memory_space<vmem>>, vector<32x32xf32>
    %c0_1 = arith.constant 0 : index
    %c0_2 = arith.constant 0 : index
    %1 = vector.load %arg2[%c0_1, %c0_2] : memref<32x128xbf16, #tpu.memory_space<vmem>>, vector<32x128xbf16>
    %c0_3 = arith.constant 0 : index
    %c0_4 = arith.constant 0 : index
    %2 = vector.load %arg3[%c0_3, %c0_4] : memref<1x128xf32, #tpu.memory_space<vmem>>, vector<1x128xf32>
    %3 = arith.truncf %0 : vector<32x32xf32> to vector<32x32xbf16>
    %cst = arith.constant dense<0.000000e+00> : vector<32x128xf32>
    %4 = tpu.matmul %3, %1, %cst {dimension_numbers = #tpu.dot_dimension_numbers<[1], [0], [0], [1], [0, 0, 1, 1], [], []>} : vector<32x32xbf16>, vector<32x128xbf16>, vector<32x128xf32> -> vector<32x128xf32>
    %5 = vector.broadcast %2 : vector<1x128xf32> to vector<32x128xf32>
    %6 = arith.addf %4, %5 : vector<32x128xf32>
    %cst_5 = arith.constant 0.000000e+00 : f32
    %7 = vector.broadcast %cst_5 : f32 to vector<32x128xf32>
    %8 = arith.maximumf %6, %7 : vector<32x128xf32>
    %c0_6 = arith.constant 0 : index
    %c0_7 = arith.constant 0 : index
    %9 = vector.load %arg4[%c0_6, %c0_7] : memref<128x128xbf16, #tpu.memory_space<vmem>>, vector<128x128xbf16>
    %c0_8 = arith.constant 0 : index
    %c0_9 = arith.constant 0 : index
    %10 = vector.load %arg5[%c0_8, %c0_9] : memref<1x128xf32, #tpu.memory_space<vmem>>, vector<1x128xf32>
    %11 = arith.truncf %8 : vector<32x128xf32> to vector<32x128xbf16>
    %cst_10 = arith.constant dense<0.000000e+00> : vector<32x128xf32>
    %12 = tpu.matmul %11, %9, %cst_10 {dimension_numbers = #tpu.dot_dimension_numbers<[1], [0], [0], [1], [0, 0, 1, 1], [], []>} : vector<32x128xbf16>, vector<128x128xbf16>, vector<32x128xf32> -> vector<32x128xf32>
    %13 = vector.broadcast %10 : vector<1x128xf32> to vector<32x128xf32>
    %14 = arith.addf %12, %13 : vector<32x128xf32>
    %cst_11 = arith.constant 0.000000e+00 : f32
    %15 = vector.broadcast %cst_11 : f32 to vector<32x128xf32>
    %16 = arith.maximumf %14, %15 : vector<32x128xf32>
    %c0_12 = arith.constant 0 : index
    %c0_13 = arith.constant 0 : index
    %17 = vector.load %arg6[%c0_12, %c0_13] : memref<128x128xbf16, #tpu.memory_space<vmem>>, vector<128x128xbf16>
    %c0_14 = arith.constant 0 : index
    %c0_15 = arith.constant 0 : index
    %18 = vector.load %arg7[%c0_14, %c0_15] : memref<1x128xf32, #tpu.memory_space<vmem>>, vector<1x128xf32>
    %19 = arith.truncf %16 : vector<32x128xf32> to vector<32x128xbf16>
    %cst_16 = arith.constant dense<0.000000e+00> : vector<32x128xf32>
    %20 = tpu.matmul %19, %17, %cst_16 {dimension_numbers = #tpu.dot_dimension_numbers<[1], [0], [0], [1], [0, 0, 1, 1], [], []>} : vector<32x128xbf16>, vector<128x128xbf16>, vector<32x128xf32> -> vector<32x128xf32>
    %21 = vector.broadcast %18 : vector<1x128xf32> to vector<32x128xf32>
    %22 = arith.addf %20, %21 : vector<32x128xf32>
    %cst_17 = arith.constant 0.000000e+00 : f32
    %23 = vector.broadcast %cst_17 : f32 to vector<32x128xf32>
    %24 = arith.maximumf %22, %23 : vector<32x128xf32>
    %c0_18 = arith.constant 0 : index
    %c0_19 = arith.constant 0 : index
    %25 = vector.load %arg8[%c0_18, %c0_19] : memref<128x128xbf16, #tpu.memory_space<vmem>>, vector<128x128xbf16>
    %c0_20 = arith.constant 0 : index
    %c0_21 = arith.constant 0 : index
    %26 = vector.load %arg9[%c0_20, %c0_21] : memref<128x32xbf16, #tpu.memory_space<vmem>>, vector<128x32xbf16>
    %c0_22 = arith.constant 0 : index
    %c0_23 = arith.constant 0 : index
    %27 = vector.load %arg10[%c0_22, %c0_23] : memref<1x32xf32, #tpu.memory_space<vmem>>, vector<1x32xf32>
    %c0_24 = arith.constant 0 : index
    %c0_25 = arith.constant 0 : index
    %28 = vector.load %arg11[%c0_24, %c0_25] : memref<128x8xbf16, #tpu.memory_space<vmem>>, vector<128x8xbf16>
    %c0_26 = arith.constant 0 : index
    %c0_27 = arith.constant 0 : index
    %29 = vector.load %arg12[%c0_26, %c0_27] : memref<1x8xf32, #tpu.memory_space<vmem>>, vector<1x8xf32>
    %30 = arith.truncf %24 : vector<32x128xf32> to vector<32x128xbf16>
    %cst_28 = arith.constant dense<0.000000e+00> : vector<32x128xf32>
    %31 = tpu.matmul %30, %25, %cst_28 {dimension_numbers = #tpu.dot_dimension_numbers<[1], [0], [0], [1], [0, 0, 1, 1], [], []>} : vector<32x128xbf16>, vector<128x128xbf16>, vector<32x128xf32> -> vector<32x128xf32>
    %cst_29 = arith.constant 0.000000e+00 : f32
    %32 = vector.broadcast %cst_29 : f32 to vector<32x128xf32>
    %33 = arith.maximumf %31, %32 : vector<32x128xf32>
    %34 = arith.truncf %33 : vector<32x128xf32> to vector<32x128xbf16>
    %cst_30 = arith.constant dense<0.000000e+00> : vector<32x32xf32>
    %35 = tpu.matmul %34, %26, %cst_30 {dimension_numbers = #tpu.dot_dimension_numbers<[1], [0], [0], [1], [0, 0, 1, 1], [], []>} : vector<32x128xbf16>, vector<128x32xbf16>, vector<32x32xf32> -> vector<32x32xf32>
    %36 = vector.broadcast %27 : vector<1x32xf32> to vector<32x32xf32>
    %37 = arith.addf %35, %36 : vector<32x32xf32>
    %c0_31 = arith.constant 0 : index
    %c0_32 = arith.constant 0 : index
    %38 = vector.load %arg13[%c0_31, %c0_32] : memref<32x32xf32, #tpu.memory_space<vmem>>, vector<32x32xf32>
    tpu.vector_store %arg13[%c0_31, %c0_32], %37 {strides = array<i32>} : memref<32x32xf32, #tpu.memory_space<vmem>>, vector<32x32xf32>,
    %cst_33 = arith.constant dense<0.000000e+00> : vector<32x8xf32>
    %39 = tpu.matmul %34, %28, %cst_33 {dimension_numbers = #tpu.dot_dimension_numbers<[1], [0], [0], [1], [0, 0, 1, 1], [], []>} : vector<32x128xbf16>, vector<128x8xbf16>, vector<32x8xf32> -> vector<32x8xf32>
    %40 = vector.broadcast %29 : vector<1x8xf32> to vector<32x8xf32>
    %41 = arith.addf %39, %40 : vector<32x8xf32>
    %c0_34 = arith.constant 0 : index
    %c0_35 = arith.constant 0 : index
    %42 = vector.load %arg14[%c0_34, %c0_35] : memref<32x8xf32, #tpu.memory_space<vmem>>, vector<32x8xf32>
    tpu.vector_store %arg14[%c0_34, %c0_35], %41 {strides = array<i32>} : memref<32x8xf32, #tpu.memory_space<vmem>>, vector<32x8xf32>,
    return
  }
  func.func @transform_0(%arg0: i32) -> (i32, i32) {
    %c0_i32 = arith.constant 0 : i32
    %c0_i32_0 = arith.constant 0 : i32
    return %arg0, %c0_i32 : i32, i32
  }
  func.func @transform_1(%arg0: i32) -> (i32, i32) {
    %c0_i32 = arith.constant 0 : i32
    %c0_i32_0 = arith.constant 0 : i32
    %c0_i32_1 = arith.constant 0 : i32
    return %c0_i32, %c0_i32_0 : i32, i32
  }
  func.func @transform_2(%arg0: i32) -> (i32, i32) {
    %c0_i32 = arith.constant 0 : i32
    %c0_i32_0 = arith.constant 0 : i32
    %c0_i32_1 = arith.constant 0 : i32
    return %c0_i32, %c0_i32_0 : i32, i32
  }
  func.func @transform_3(%arg0: i32) -> (i32, i32) {
    %c0_i32 = arith.constant 0 : i32
    %c0_i32_0 = arith.constant 0 : i32
    %c0_i32_1 = arith.constant 0 : i32
    return %c0_i32, %c0_i32_0 : i32, i32
  }
  func.func @transform_4(%arg0: i32) -> (i32, i32) {
    %c0_i32 = arith.constant 0 : i32
    %c0_i32_0 = arith.constant 0 : i32
    %c0_i32_1 = arith.constant 0 : i32
    return %c0_i32, %c0_i32_0 : i32, i32
  }
  func.func @transform_5(%arg0: i32) -> (i32, i32) {
    %c0_i32 = arith.constant 0 : i32
    %c0_i32_0 = arith.constant 0 : i32
    %c0_i32_1 = arith.constant 0 : i32
    return %c0_i32, %c0_i32_0 : i32, i32
  }
  func.func @transform_6(%arg0: i32) -> (i32, i32) {
    %c0_i32 = arith.constant 0 : i32
    %c0_i32_0 = arith.constant 0 : i32
    %c0_i32_1 = arith.constant 0 : i32
    return %c0_i32, %c0_i32_0 : i32, i32
  }
  func.func @transform_7(%arg0: i32) -> (i32, i32) {
    %c0_i32 = arith.constant 0 : i32
    %c0_i32_0 = arith.constant 0 : i32
    %c0_i32_1 = arith.constant 0 : i32
    return %c0_i32, %c0_i32_0 : i32, i32
  }
  func.func @transform_8(%arg0: i32) -> (i32, i32) {
    %c0_i32 = arith.constant 0 : i32
    %c0_i32_0 = arith.constant 0 : i32
    %c0_i32_1 = arith.constant 0 : i32
    return %c0_i32, %c0_i32_0 : i32, i32
  }
  func.func @transform_9(%arg0: i32) -> (i32, i32) {
    %c0_i32 = arith.constant 0 : i32
    %c0_i32_0 = arith.constant 0 : i32
    %c0_i32_1 = arith.constant 0 : i32
    return %c0_i32, %c0_i32_0 : i32, i32
  }
  func.func @transform_10(%arg0: i32) -> (i32, i32) {
    %c0_i32 = arith.constant 0 : i32
    %c0_i32_0 = arith.constant 0 : i32
    %c0_i32_1 = arith.constant 0 : i32
    return %c0_i32, %c0_i32_0 : i32, i32
  }
  func.func @transform_11(%arg0: i32) -> (i32, i32) {
    %c0_i32 = arith.constant 0 : i32
    %c0_i32_0 = arith.constant 0 : i32
    %c0_i32_1 = arith.constant 0 : i32
    return %c0_i32, %c0_i32_0 : i32, i32
  }
  func.func @transform_12(%arg0: i32) -> (i32, i32) {
    %c0_i32 = arith.constant 0 : i32
    %c0_i32_0 = arith.constant 0 : i32
    return %arg0, %c0_i32 : i32, i32
  }
  func.func @transform_13(%arg0: i32) -> (i32, i32) {
    %c0_i32 = arith.constant 0 : i32
    %c0_i32_0 = arith.constant 0 : i32
    return %arg0, %c0_i32 : i32, i32
  }
}

</mosaic_0001>

<llo_original>
// kernel: nbeats_generic_block.1
$region0: #{nbeats_generic_block.1}
  #allocation0 [shape = 'u32[]', space=smem, size = 0x4, offset = 0x4, fixed_abs, tag = 'smem constant byte address 0x4 - core index']
  #allocation1 [shape = 'u32[144,128]{1,0:T(1,128)}', space=vmem, size = 0x12000, scoped, tag = 'internal scratch']
  %s0 = inlined_call_operand.vmem [shape: f32[64,32], index: 0, kind: input, shape index: {}]
  %s1 = inlined_call_operand.vmem [shape: bf16[32,128], index: 1, kind: input, shape index: {}]
  %s2 = inlined_call_operand.vmem [shape: f32[1,128], index: 2, kind: input, shape index: {}]
  %s3 = inlined_call_operand.vmem [shape: bf16[128,128], index: 3, kind: input, shape index: {}]
  %s4 = inlined_call_operand.vmem [shape: f32[1,128], index: 4, kind: input, shape index: {}]
  %s5 = inlined_call_operand.vmem [shape: bf16[128,128], index: 5, kind: input, shape index: {}]
  %s6 = inlined_call_operand.vmem [shape: f32[1,128], index: 6, kind: input, shape index: {}]
  %s7 = inlined_call_operand.vmem [shape: bf16[128,128], index: 7, kind: input, shape index: {}]
  %s8 = inlined_call_operand.vmem [shape: bf16[128,32], index: 8, kind: input, shape index: {}]
  %s9 = inlined_call_operand.vmem [shape: f32[1,32], index: 9, kind: input, shape index: {}]
  %s10 = inlined_call_operand.vmem [shape: bf16[128,8], index: 10, kind: input, shape index: {}]
  %s11 = inlined_call_operand.vmem [shape: f32[1,8], index: 11, kind: input, shape index: {}]
  %s12 = inlined_call_operand.vmem [shape: f32[64,32], index: 12, kind: output, shape index: {0}]
  %s13 = inlined_call_operand.vmem [shape: f32[64,8], index: 13, kind: output, shape index: {1}]
  %14 = xla_tuple %s12, %s13
  %s15 = sld [smem:[#allocation0]]
  $region89: #{nbeats_generic_block.1} parent=0
    _
  %s17 = ssub.s32 1, %s15
  %s18 = scalar_select 0, %s17, %s15
  loop: start=0, step=1, limit=4
  $region2: #{nbeats_generic_block.1} parent=0 // loop_pre_header
    _
  $region3: #{nbeats_generic_block.1} parent=0 // loop_header
    %s20 = sphi 0, %s24
    %p21 = scmp.ge.s32.totalorder %s20, 4
    %s30 = sphi 0, %s32
    %s33 = sphi 0, %s30
    %s34 = sphi 0, %s33
    %s50 = sphi 0, %s34
    %s54 = sphi 0, %s54
    %s56 = sphi 0, %s54
    %s57 = sphi 0, %s56
    %s71 = sphi 0, %s57
    %s75 = sphi 0, %s75
    %s77 = sphi 0, %s75
    %s78 = sphi 0, %s77
    %s92 = sphi 0, %s78
    %s96 = sphi 0, %s96
    %s98 = sphi 0, %s96
    %s99 = sphi 0, %s98
    %s113 = sphi 0, %s99
    %s117 = sphi 0, %s117
    %s119 = sphi 0, %s117
    %s120 = sphi 0, %s119
    %s134 = sphi 0, %s120
    %s138 = sphi 0, %s138
    %s140 = sphi 0, %s138
    %s141 = sphi 0, %s140
    %s155 = sphi 0, %s141
    %s159 = sphi 0, %s159
    %s161 = sphi 0, %s159
    %s162 = sphi 0, %s161
    %s176 = sphi 0, %s162
    %s180 = sphi 0, %s180
    %s182 = sphi 0, %s180
    %s183 = sphi 0, %s182
    %s197 = sphi 0, %s183
    %s201 = sphi 0, %s201
    %s203 = sphi 0, %s201
    %s204 = sphi 0, %s203
    %s218 = sphi 0, %s204
    %s222 = sphi 0, %s222
    %s224 = sphi 0, %s222
    %s225 = sphi 0, %s224
    %s239 = sphi 0, %s225
    %s243 = sphi 0, %s243
    %s245 = sphi 0, %s243
    %s246 = sphi 0, %s245
    %s260 = sphi 0, %s246
    %s264 = sphi 0, %s264
    %s266 = sphi 0, %s264
    %s267 = sphi 0, %s266
    %s281 = sphi 0, %s267
    %s287 = sphi 0, %s289
    %s290 = sphi 0, %s287
    %s291 = sphi 0, %s290
    %s307 = sphi 0, %s291
    %s313 = sphi 0, %s315
    %s316 = sphi 0, %s313
    %s317 = sphi 0, %s316
    %s333 = sphi 0, %s317
  $region4: #{nbeats_generic_block.1} parent=0 // loop_header_branch
    %23 = sbr.rel (%p21) target = $region8
  $region5: #{nbeats_generic_block.1} parent=0 // loop_body
    %s25 = ssub.s32 %s20, 1
    %s26 = ssub.s32 %s20, 2
    %s27 = sadd.s32 %s20, 1
    %s28 = ssub.s32 %s20, %s27
    %p29 = scmp.eq.s32.totalorder %s28, 0
    %s31 = sadd.s32 %s30, 1
    %s32 = scalar_select %p29, %s30, %s31
    %p35 = pneg %p29
    %p36 = scmp.eq.s32.totalorder %s20, 1
    %p37 = por %p35, %p36
    %p38 = scmp.ne.s32.totalorder %s30, %s33
    %p39 = scmp.eq.s32.totalorder %s20, 0
    %p40 = por %p38, %p39
    %p41 = scmp.ne.s32.totalorder %s30, %s33
    %p42 = scmp.eq.s32.totalorder %s25, 1
    %p43 = por %p41, %p42
    %p44 = scmp.ne.s32.totalorder %s33, %s34
    %p45 = scmp.eq.s32.totalorder %s25, 0
    %p46 = por %p44, %p45
    %p47 = scmp.ne.s32.totalorder %s33, %s34
    %p48 = scmp.eq.s32.totalorder %s26, 1
    %p49 = por %p47, %p48
    %p51 = scmp.ne.s32.totalorder %s34, %s50
    %p52 = scmp.eq.s32.totalorder %s26, 0
    %p53 = por %p51, %p52
    %s55 = sadd.s32 %s54, 1
    %p58 = scmp.eq.s32.totalorder %s20, 1
    %p59 = scmp.ne.s32.totalorder %s54, %s56
    %p60 = scmp.eq.s32.totalorder %s20, 0
    %p61 = por %p59, %p60
    %p62 = scmp.ne.s32.totalorder %s54, %s56
    %p63 = scmp.eq.s32.totalorder %s25, 1
    %p64 = por %p62, %p63
    %p65 = scmp.ne.s32.totalorder %s56, %s57
    %p66 = scmp.eq.s32.totalorder %s25, 0
    %p67 = por %p65, %p66
    %p68 = scmp.ne.s32.totalorder %s56, %s57
    %p69 = scmp.eq.s32.totalorder %s26, 1
    %p70 = por %p68, %p69
    %p72 = scmp.ne.s32.totalorder %s57, %s71
    %p73 = scmp.eq.s32.totalorder %s26, 0
    %p74 = por %p72, %p73
    %s76 = sadd.s32 %s75, 1
    %p79 = scmp.eq.s32.totalorder %s20, 1
    %p80 = scmp.ne.s32.totalorder %s75, %s77
    %p81 = scmp.eq.s32.totalorder %s20, 0
    %p82 = por %p80, %p81
    %p83 = scmp.ne.s32.totalorder %s75, %s77
    %p84 = scmp.eq.s32.totalorder %s25, 1
    %p85 = por %p83, %p84
    %p86 = scmp.ne.s32.totalorder %s77, %s78
    %p87 = scmp.eq.s32.totalorder %s25, 0
    %p88 = por %p86, %p87
    %p89 = scmp.ne.s32.totalorder %s77, %s78
    %p90 = scmp.eq.s32.totalorder %s26, 1
    %p91 = por %p89, %p90
    %p93 = scmp.ne.s32.totalorder %s78, %s92
    %p94 = scmp.eq.s32.totalorder %s26, 0
    %p95 = por %p93, %p94
    %s97 = sadd.s32 %s96, 1
    %p100 = scmp.eq.s32.totalorder %s20, 1
    %p101 = scmp.ne.s32.totalorder %s96, %s98
    %p102 = scmp.eq.s32.totalorder %s20, 0
    %p103 = por %p101, %p102
    %p104 = scmp.ne.s32.totalorder %s96, %s98
    %p105 = scmp.eq.s32.totalorder %s25, 1
    %p106 = por %p104, %p105
    %p107 = scmp.ne.s32.totalorder %s98, %s99
    %p108 = scmp.eq.s32.totalorder %s25, 0
    %p109 = por %p107, %p108
    %p110 = scmp.ne.s32.totalorder %s98, %s99
    %p111 = scmp.eq.s32.totalorder %s26, 1
    %p112 = por %p110, %p111
    %p114 = scmp.ne.s32.totalorder %s99, %s113
    %p115 = scmp.eq.s32.totalorder %s26, 0
    %p116 = por %p114, %p115
    %s118 = sadd.s32 %s117, 1
    %p121 = scmp.eq.s32.totalorder %s20, 1
    %p122 = scmp.ne.s32.totalorder %s117, %s119
    %p123 = scmp.eq.s32.totalorder %s20, 0
    %p124 = por %p122, %p123
    %p125 = scmp.ne.s32.totalorder %s117, %s119
    %p126 = scmp.eq.s32.totalorder %s25, 1
    %p127 = por %p125, %p126
    %p128 = scmp.ne.s32.totalorder %s119, %s120
    %p129 = scmp.eq.s32.totalorder %s25, 0
    %p130 = por %p128, %p129
    %p131 = scmp.ne.s32.totalorder %s119, %s120
    %p132 = scmp.eq.s32.totalorder %s26, 1
    %p133 = por %p131, %p132
    %p135 = scmp.ne.s32.totalorder %s120, %s134
    %p136 = scmp.eq.s32.totalorder %s26, 0
    %p137 = por %p135, %p136
    %s139 = sadd.s32 %s138, 1
    %p142 = scmp.eq.s32.totalorder %s20, 1
    %p143 = scmp.ne.s32.totalorder %s138, %s140
    %p144 = scmp.eq.s32.totalorder %s20, 0
    %p145 = por %p143, %p144
    %p146 = scmp.ne.s32.totalorder %s138, %s140
    %p147 = scmp.eq.s32.totalorder %s25, 1
    %p148 = por %p146, %p147
    %p149 = scmp.ne.s32.totalorder %s140, %s141
    %p150 = scmp.eq.s32.totalorder %s25, 0
    %p151 = por %p149, %p150
    %p152 = scmp.ne.s32.totalorder %s140, %s141
    %p153 = scmp.eq.s32.totalorder %s26, 1
    %p154 = por %p152, %p153
    %p156 = scmp.ne.s32.totalorder %s141, %s155
    %p157 = scmp.eq.s32.totalorder %s26, 0
    %p158 = por %p156, %p157
    %s160 = sadd.s32 %s159, 1
    %p163 = scmp.eq.s32.totalorder %s20, 1
    %p164 = scmp.ne.s32.totalorder %s159, %s161
    %p165 = scmp.eq.s32.totalorder %s20, 0
    %p166 = por %p164, %p165
    %p167 = scmp.ne.s32.totalorder %s159, %s161
    %p168 = scmp.eq.s32.totalorder %s25, 1
    %p169 = por %p167, %p168
    %p170 = scmp.ne.s32.totalorder %s161, %s162
    %p171 = scmp.eq.s32.totalorder %s25, 0
    %p172 = por %p170, %p171
    %p173 = scmp.ne.s32.totalorder %s161, %s162
    %p174 = scmp.eq.s32.totalorder %s26, 1
    %p175 = por %p173, %p174
    %p177 = scmp.ne.s32.totalorder %s162, %s176
    %p178 = scmp.eq.s32.totalorder %s26, 0
    %p179 = por %p177, %p178
    %s181 = sadd.s32 %s180, 1
    %p184 = scmp.eq.s32.totalorder %s20, 1
    %p185 = scmp.ne.s32.totalorder %s180, %s182
    %p186 = scmp.eq.s32.totalorder %s20, 0
    %p187 = por %p185, %p186
    %p188 = scmp.ne.s32.totalorder %s180, %s182
    %p189 = scmp.eq.s32.totalorder %s25, 1
    %p190 = por %p188, %p189
    %p191 = scmp.ne.s32.totalorder %s182, %s183
    %p192 = scmp.eq.s32.totalorder %s25, 0
    %p193 = por %p191, %p192
    %p194 = scmp.ne.s32.totalorder %s182, %s183
    %p195 = scmp.eq.s32.totalorder %s26, 1
    %p196 = por %p194, %p195
    %p198 = scmp.ne.s32.totalorder %s183, %s197
    %p199 = scmp.eq.s32.totalorder %s26, 0
    %p200 = por %p198, %p199
    %s202 = sadd.s32 %s201, 1
    %p205 = scmp.eq.s32.totalorder %s20, 1
    %p206 = scmp.ne.s32.totalorder %s201, %s203
    %p207 = scmp.eq.s32.totalorder %s20, 0
    %p208 = por %p206, %p207
    %p209 = scmp.ne.s32.totalorder %s201, %s203
    %p210 = scmp.eq.s32.totalorder %s25, 1
    %p211 = por %p209, %p210
    %p212 = scmp.ne.s32.totalorder %s203, %s204
    %p213 = scmp.eq.s32.totalorder %s25, 0
    %p214 = por %p212, %p213
    %p215 = scmp.ne.s32.totalorder %s203, %s204
    %p216 = scmp.eq.s32.totalorder %s26, 1
    %p217 = por %p215, %p216
    %p219 = scmp.ne.s32.totalorder %s204, %s218
    %p220 = scmp.eq.s32.totalorder %s26, 0
    %p221 = por %p219, %p220
    %s223 = sadd.s32 %s222, 1
    %p226 = scmp.eq.s32.totalorder %s20, 1
    %p227 = scmp.ne.s32.totalorder %s222, %s224
    %p228 = scmp.eq.s32.totalorder %s20, 0
    %p229 = por %p227, %p228
    %p230 = scmp.ne.s32.totalorder %s222, %s224
    %p231 = scmp.eq.s32.totalorder %s25, 1
    %p232 = por %p230, %p231
    %p233 = scmp.ne.s32.totalorder %s224, %s225
    %p234 = scmp.eq.s32.totalorder %s25, 0
    %p235 = por %p233, %p234
    %p236 = scmp.ne.s32.totalorder %s224, %s225
    %p237 = scmp.eq.s32.totalorder %s26, 1
    %p238 = por %p236, %p237
    %p240 = scmp.ne.s32.totalorder %s225, %s239
    %p241 = scmp.eq.s32.totalorder %s26, 0
    %p242 = por %p240, %p241
    %s244 = sadd.s32 %s243, 1
    %p247 = scmp.eq.s32.totalorder %s20, 1
    %p248 = scmp.ne.s32.totalorder %s243, %s245
    %p249 = scmp.eq.s32.totalorder %s20, 0
    %p250 = por %p248, %p249
    %p251 = scmp.ne.s32.totalorder %s243, %s245
    %p252 = scmp.eq.s32.totalorder %s25, 1
    %p253 = por %p251, %p252
    %p254 = scmp.ne.s32.totalorder %s245, %s246
    %p255 = scmp.eq.s32.totalorder %s25, 0
    %p256 = por %p254, %p255
    %p257 = scmp.ne.s32.totalorder %s245, %s246
    %p258 = scmp.eq.s32.totalorder %s26, 1
    %p259 = por %p257, %p258
    %p261 = scmp.ne.s32.totalorder %s246, %s260
    %p262 = scmp.eq.s32.totalorder %s26, 0
    %p263 = por %p261, %p262
    %s265 = sadd.s32 %s264, 1
    %p268 = scmp.eq.s32.totalorder %s20, 1
    %p269 = scmp.ne.s32.totalorder %s264, %s266
    %p270 = scmp.eq.s32.totalorder %s20, 0
    %p271 = por %p269, %p270
    %p272 = scmp.ne.s32.totalorder %s264, %s266
    %p273 = scmp.eq.s32.totalorder %s25, 1
    %p274 = por %p272, %p273
    %p275 = scmp.ne.s32.totalorder %s266, %s267
    %p276 = scmp.eq.s32.totalorder %s25, 0
    %p277 = por %p275, %p276
    %p278 = scmp.ne.s32.totalorder %s266, %s267
    %p279 = scmp.eq.s32.totalorder %s26, 1
    %p280 = por %p278, %p279
    %p282 = scmp.ne.s32.totalorder %s267, %s281
    %p283 = scmp.eq.s32.totalorder %s26, 0
    %p284 = por %p282, %p283
    %s285 = ssub.s32 %s20, %s27
    %p286 = scmp.eq.s32.totalorder %s285, 0
    %s288 = sadd.s32 %s287, 1
    %s289 = scalar_select %p286, %s287, %s288
    %p292 = pneg %p286
    %p293 = scmp.eq.s32.totalorder %s20, 1
    %p294 = por %p292, %p293
    %p295 = scmp.ne.s32.totalorder %s287, %s290
    %p296 = scmp.eq.s32.totalorder %s20, 0
    %p297 = por %p295, %p296
    %p298 = scmp.ne.s32.totalorder %s287, %s290
    %p299 = scmp.eq.s32.totalorder %s25, 1
    %p300 = por %p298, %p299
    %p301 = scmp.ne.s32.totalorder %s290, %s291
    %p302 = scmp.eq.s32.totalorder %s25, 0
    %p303 = por %p301, %p302
    %p304 = scmp.ne.s32.totalorder %s290, %s291
    %p305 = scmp.eq.s32.totalorder %s26, 1
    %p306 = por %p304, %p305
    %p308 = scmp.ne.s32.totalorder %s291, %s307
    %p309 = scmp.eq.s32.totalorder %s26, 0
    %p310 = por %p308, %p309
    %s311 = ssub.s32 %s20, %s27
    %p312 = scmp.eq.s32.totalorder %s311, 0
    %s314 = sadd.s32 %s313, 1
    %s315 = scalar_select %p312, %s313, %s314
    %p318 = pneg %p312
    %p319 = scmp.eq.s32.totalorder %s20, 1
    %p320 = por %p318, %p319
    %p321 = scmp.ne.s32.totalorder %s313, %s316
    %p322 = scmp.eq.s32.totalorder %s20, 0
    %p323 = por %p321, %p322
    %p324 = scmp.ne.s32.totalorder %s313, %s316
    %p325 = scmp.eq.s32.totalorder %s25, 1
    %p326 = por %p324, %p325
    %p327 = scmp.ne.s32.totalorder %s316, %s317
    %p328 = scmp.eq.s32.totalorder %s25, 0
    %p329 = por %p327, %p328
    %p330 = scmp.ne.s32.totalorder %s316, %s317
    %p331 = scmp.eq.s32.totalorder %s26, 1
    %p332 = por %p330, %p331
    %p334 = scmp.ne.s32.totalorder %s317, %s333
    %p335 = scmp.eq.s32.totalorder %s26, 0
    %p336 = por %p334, %p335
    %p337 = scmp.le.s32.totalorder 1, %s20
    %p338 = scmp.lt.s32.totalorder %s20, 3
    %p339 = pnand %p337, %p338
    %p340 = pneg %p339
    // Predicated region
    $region9: #{nbeats_generic_block.1} parent=5 // pred_check
      _
    $region10: #{nbeats_generic_block.1} parent=5 // pred_check_branch
      %342 = sbr.rel (%p339) target = $region12
    $region11: #{nbeats_generic_block.1} parent=5 // pred_region
      %s343 = ssub.s32 %s20, 1
      // Predicated region
      $region13: #{nbeats_generic_block.1} parent=11 // pred_check
        %p344 = pneg %p67
      $region14: #{nbeats_generic_block.1} parent=11 // pred_check_branch
        %346 = sbr.rel (%p344) target = $region16
      $region15: #{nbeats_generic_block.1} parent=11 // pred_region
        _
      $region16: #{nbeats_generic_block.1} parent=11 // pred_fallthru
        _
      // Predicated region
      $region17: #{nbeats_generic_block.1} parent=11 // pred_check
        %p347 = pneg %p88
      $region18: #{nbeats_generic_block.1} parent=11 // pred_check_branch
        %349 = sbr.rel (%p347) target = $region20
      $region19: #{nbeats_generic_block.1} parent=11 // pred_region
        _
      $region20: #{nbeats_generic_block.1} parent=11 // pred_fallthru
        _
      // Predicated region
      $region21: #{nbeats_generic_block.1} parent=11 // pred_check
        %p350 = pneg %p109
      $region22: #{nbeats_generic_block.1} parent=11 // pred_check_branch
        %352 = sbr.rel (%p350) target = $region24
      $region23: #{nbeats_generic_block.1} parent=11 // pred_region
        _
      $region24: #{nbeats_generic_block.1} parent=11 // pred_fallthru
        _
      // Predicated region
      $region25: #{nbeats_generic_block.1} parent=11 // pred_check
        %p353 = pneg %p130
      $region26: #{nbeats_generic_block.1} parent=11 // pred_check_branch
        %355 = sbr.rel (%p353) target = $region28
      $region27: #{nbeats_generic_block.1} parent=11 // pred_region
        _
      $region28: #{nbeats_generic_block.1} parent=11 // pred_fallthru
        _
      // Predicated region
      $region29: #{nbeats_generic_block.1} parent=11 // pred_check
        %p356 = pneg %p151
      $region30: #{nbeats_generic_block.1} parent=11 // pred_check_branch
        %358 = sbr.rel (%p356) target = $region32
      $region31: #{nbeats_generic_block.1} parent=11 // pred_region
        _
      $region32: #{nbeats_generic_block.1} parent=11 // pred_fallthru
        _
      // Predicated region
      $region33: #{nbeats_generic_block.1} parent=11 // pred_check
        %p359 = pneg %p172
      $region34: #{nbeats_generic_block.1} parent=11 // pred_check_branch
        %361 = sbr.rel (%p359) target = $region36
      $region35: #{nbeats_generic_block.1} parent=11 // pred_region
        _
      $region36: #{nbeats_generic_block.1} parent=11 // pred_fallthru
        _
      // Predicated region
      $region37: #{nbeats_generic_block.1} parent=11 // pred_check
        %p362 = pneg %p193
      $region38: #{nbeats_generic_block.1} parent=11 // pred_check_branch
        %364 = sbr.rel (%p362) target = $region40
      $region39: #{nbeats_generic_block.1} parent=11 // pred_region
        _
      $region40: #{nbeats_generic_block.1} parent=11 // pred_fallthru
        _
      // Predicated region
      $region41: #{nbeats_generic_block.1} parent=11 // pred_check
        %p365 = pneg %p214
      $region42: #{nbeats_generic_block.1} parent=11 // pred_check_branch
        %367 = sbr.rel (%p365) target = $region44
      $region43: #{nbeats_generic_block.1} parent=11 // pred_region
        _
      $region44: #{nbeats_generic_block.1} parent=11 // pred_fallthru
        _
      // Predicated region
      $region45: #{nbeats_generic_block.1} parent=11 // pred_check
        %p368 = pneg %p235
      $region46: #{nbeats_generic_block.1} parent=11 // pred_check_branch
        %370 = sbr.rel (%p368) target = $region48
      $region47: #{nbeats_generic_block.1} parent=11 // pred_region
        _
      $region48: #{nbeats_generic_block.1} parent=11 // pred_fallthru
        _
      // Predicated region
      $region49: #{nbeats_generic_block.1} parent=11 // pred_check
        %p371 = pneg %p256
      $region50: #{nbeats_generic_block.1} parent=11 // pred_check_branch
        %373 = sbr.rel (%p371) target = $region52
      $region51: #{nbeats_generic_block.1} parent=11 // pred_region
        _
      $region52: #{nbeats_generic_block.1} parent=11 // pred_fallthru
        _
      // Predicated region
      $region53: #{nbeats_generic_block.1} parent=11 // pred_check
        %p374 = pneg %p277
      $region54: #{nbeats_generic_block.1} parent=11 // pred_check_branch
        %376 = sbr.rel (%p374) target = $region56
      $region55: #{nbeats_generic_block.1} parent=11 // pred_region
        _
      $region56: #{nbeats_generic_block.1} parent=11 // pred_fallthru
        _
    $region12: #{nbeats_generic_block.1} parent=5 // pred_fallthru
      _
    %p377 = scmp.lt.s32.totalorder %s20, 2
    // Predicated region
    $region57: #{nbeats_generic_block.1} parent=5 // pred_check
      %p378 = pneg %p377
    $region58: #{nbeats_generic_block.1} parent=5 // pred_check_branch
      %380 = sbr.rel (%p378) target = $region60
    $region59: #{nbeats_generic_block.1} parent=5 // pred_region
      // Predicated region
      $region61: #{nbeats_generic_block.1} parent=59 // pred_check
        %p381 = pneg %p40
      $region62: #{nbeats_generic_block.1} parent=59 // pred_check_branch
        %383 = sbr.rel (%p381) target = $region64
      $region63: #{nbeats_generic_block.1} parent=59 // pred_region
        %s384 = smul.u32 4, %s20
        %p385 = scmp.lt.s32.totalorder %s384, 7
        %s386 = scalar_select %p385, %s384, 7
        %s387 = smul.addr %s386, 8
        %s388 = scalar_lea.vmem %s0, %s387
        %s389 = smul.u32 4, %s20
      $region64: #{nbeats_generic_block.1} parent=59 // pred_fallthru
        _
    $region60: #{nbeats_generic_block.1} parent=5 // pred_fallthru
      _
    %p390 = scmp.le.s32.totalorder 1, %s20
    %p391 = scmp.lt.s32.totalorder %s20, 3
    %p392 = pnand %p390, %p391
    %p393 = pneg %p392
    // Predicated region
    $region65: #{nbeats_generic_block.1} parent=5 // pred_check
      _
    $region66: #{nbeats_generic_block.1} parent=5 // pred_check_branch
      %395 = sbr.rel (%p392) target = $region68
    $region67: #{nbeats_generic_block.1} parent=5 // pred_region
      %s396 = ssub.s32 %s20, 1
      %s397 = smul.u32 4, %s25
      %p398 = scmp.lt.s32.totalorder %s397, 7
      %s399 = scalar_select %p398, %s397, 7
      %s400 = smul.addr %s399, 8
      %s401 = scalar_lea.vmem %s0, %s400
      %p402 = pneg %p46
      %p403 = pneg %p43
      %p404 = pneg %p67
      %p405 = pneg %p64
      %p406 = pneg %p88
      %p407 = pneg %p85
      %p408 = pneg %p109
      %p409 = pneg %p106
      %p410 = pneg %p130
      %p411 = pneg %p127
      %p412 = pneg %p151
      %p413 = pneg %p148
      %p414 = pneg %p172
      %p415 = pneg %p169
      %p416 = pneg %p193
      %p417 = pneg %p190
      %p418 = pneg %p214
      %p419 = pneg %p211
      %p420 = pneg %p235
      %p421 = pneg %p232
      %p422 = pneg %p256
      %p423 = pneg %p253
      %p424 = pneg %p277
      %p425 = pneg %p274
      %p426 = pneg %p303
      %p427 = pneg %p300
      %s428 = smul.u32 4, %s25
      %p429 = scmp.lt.s32.totalorder %s428, 7
      %s430 = scalar_select %p429, %s428, 7
      %s431 = smul.addr %s430, 8
      %s432 = scalar_lea.vmem %s12, %s431
      %p433 = pneg %p329
      %p434 = pneg %p326
      %s435 = smul.u32 4, %s25
      %p436 = scmp.lt.s32.totalorder %s435, 7
      %s437 = scalar_select %p436, %s435, 7
      %s438 = smul.addr %s437, 8
      %s439 = scalar_lea.vmem %s13, %s438
      %s440 = smul.u32 4, %s25
      %p441 = scmp.lt.s32.totalorder %s440, 7
      %s442 = scalar_select %p441, %s440, 7
      %s443 = smul.addr %s442, 8
      %s444 = scalar_lea.vmem %s0, %s443
      %s445 = smul.u32 4, %s25
      %s446 = smul.u32 4, %s25
      %p447 = scmp.lt.s32.totalorder %s446, 7
      %s448 = scalar_select %p447, %s446, 7
      %s449 = smul.addr %s448, 8
      %s450 = scalar_lea.vmem %s12, %s449
      %s451 = smul.u32 4, %s25
      %s452 = smul.u32 4, %s25
      %p453 = scmp.lt.s32.totalorder %s452, 7
      %s454 = scalar_select %p453, %s452, 7
      %s455 = smul.addr %s454, 8
      %s456 = scalar_lea.vmem %s13, %s455
      %s457 = smul.u32 4, %s25
      %v459 = vld [vmem:[%s444] sm:$0xff]
      %v460 = vld [vmem:[%s444 + $0x8] sm:$0xff]
      %v461 = vld [vmem:[%s444 + $0x10] sm:$0xff]
      %v462 = vld [vmem:[%s444 + $0x18] sm:$0xff]
      %v463 = vld [vmem:[%s1] sm:$0xf]
      %v464 = vld [vmem:[%s1 + $0x4] sm:$0xf]
      %v465 = vld [vmem:[%s1 + $0x8] sm:$0xf]
      %v466 = vld [vmem:[%s1 + $0xc] sm:$0xf]
      %v467 = vld [vmem:[%s2] sm:$0x1]
      %v468 = vpack.c.bf16 %v460, %v459
      %v469 = vpack.c.bf16 %v462, %v461
      %v471 = vlaneseq
      %v472 = vshrl.u32 %v471, 7
      %v473 = vsub.s32 0, %v472
      %v474 = vrot.slane %v467, %v473
      %v480 = vunpack.c.l.b16 %v463
      %v481 = vunpack.c.l.b16 %v464
      %v482 = vunpack.c.l.b16 %v465
      %v483 = vunpack.c.l.b16 %v466
      %v484 = vpack.c.b16 %v481, %v480
      %v485 = vpack.c.b16 %v483, %v482
      %vm488 = vcmask 261120
      %v490 = vsel %vm488, %v468, 0
      %v493 = vsel %vm488, %v469, 0
      %495 = vmatprep.subr.bf16.mxu0 0
      %496 = vmatpush1.bf16.msra.mxu0 0
      %497 = vmatprep.subr.bf16.mxu0 0
      %498 = vmatpush1.bf16.msra.mxu0 0
      %499 = vmatprep.subr.bf16.mxu0 0
      %500 = vmatpush1.bf16.msra.mxu0 0
      %501 = vmatprep.subr.bf16.mxu0 0
      %502 = vmatpush1.bf16.msra.mxu0 0
      %503 = vmatprep.subr.bf16.mxu0 0
      %504 = vmatpush1.bf16.msra.mxu0 0
      %505 = vmatprep.subr.bf16.mxu0 0
      %506 = vmatpush1.bf16.msra.mxu0 0
      %507 = vmatprep.subr.bf16.mxu0 0
      %508 = vmatpush1.bf16.msra.mxu0 %v485
      %509 = vmatprep.subr.bf16.mxu0 0
      %510 = vmatpush1.bf16.msra.mxu0 %v484
      %511 = vmatprep.subr.bf16.mxu0 0
      %512 = vmatpush2.bf16.msra.mxu0 0
      %513 = vmatprep.subr.bf16.mxu0 0
      %514 = vmatpush2.bf16.msra.mxu0 0
      %515 = vmatprep.subr.bf16.mxu0 0
      %516 = vmatpush2.bf16.msra.mxu0 0
      %517 = vmatprep.subr.bf16.mxu0 0
      %518 = vmatpush2.bf16.msra.mxu0 0
      %519 = vmatprep.subr.bf16.mxu0 0
      %520 = vmatpush2.bf16.msra.mxu0 0
      %521 = vmatprep.subr.bf16.mxu0 0
      %522 = vmatpush2.bf16.msra.mxu0 0
      %523 = vmatprep.subr.bf16.mxu0 0
      %524 = vmatpush2.bf16.msra.mxu0 0
      %525 = vmatprep.subr.bf16.mxu0 0
      %526 = vmatpush2.bf16.msra.mxu0 0
      %527 = vmatprep.mubr.bf16.mxu0 0
      %528 = vmatmul.mubr.bf16.gmra.mxu0 %v490
      %v529 = vpop.f32.mrf.mxu0
      %v530 = vadd.f32 %v474, %v529
      %v531 = vpop.f32.mrf.mxu0
      %v532 = vpop.f32.mrf.mxu0
      %v533 = vadd.f32 %v474, %v532
      %v534 = vpop.f32.mrf.mxu0
      %535 = vmatprep.mubr.bf16.mxu0 0
      %536 = vmatmul.mubr.bf16.gmra.mxu0 %v493
      %v537 = vpop.f32.mrf.mxu0
      %v538 = vadd.f32 %v474, %v537
      %v539 = vpop.f32.mrf.mxu0
      %v540 = vpop.f32.mrf.mxu0
      %v541 = vadd.f32 %v474, %v540
      %v542 = vpop.f32.mrf.mxu0
      %543 = vdwg.mxu0
      %v544 = vmax.f32 %v530, 0.0
      %v545 = vmax.f32 %v533, 0.0
      %v546 = vmax.f32 %v538, 0.0
      %v547 = vmax.f32 %v541, 0.0
      %v548 = vld [vmem:[%s3] sm:$0xf]
      %v549 = vld [vmem:[%s3 + $0x4] sm:$0xf]
      %v550 = vld [vmem:[%s3 + $0x8] sm:$0xf]
      %v551 = vld [vmem:[%s3 + $0xc] sm:$0xf]
      %v552 = vld [vmem:[%s3 + $0x10] sm:$0xf]
      %v553 = vld [vmem:[%s3 + $0x14] sm:$0xf]
      %v554 = vld [vmem:[%s3 + $0x18] sm:$0xf]
      %v555 = vld [vmem:[%s3 + $0x1c] sm:$0xf]
      %v556 = vld [vmem:[%s3 + $0x20] sm:$0xf]
      %v557 = vld [vmem:[%s3 + $0x24] sm:$0xf]
      %v558 = vld [vmem:[%s3 + $0x28] sm:$0xf]
      %v559 = vld [vmem:[%s3 + $0x2c] sm:$0xf]
      %v560 = vld [vmem:[%s3 + $0x30] sm:$0xf]
      %v561 = vld [vmem:[%s3 + $0x34] sm:$0xf]
      %v562 = vld [vmem:[%s3 + $0x38] sm:$0xf]
      %v563 = vld [vmem:[%s3 + $0x3c] sm:$0xf]
      %v564 = vld [vmem:[%s4] sm:$0x1]
      %v565 = vpack.c.bf16 %v545, %v544
      %v566 = vpack.c.bf16 %v547, %v546
      %v568 = vlaneseq
      %v569 = vshrl.u32 %v568, 7
      %v570 = vsub.s32 0, %v569
      %v571 = vrot.slane %v564, %v570
      %v589 = vunpack.c.l.b16 %v548
      %v590 = vunpack.c.l.b16 %v549
      %v591 = vunpack.c.l.b16 %v550
      %v592 = vunpack.c.l.b16 %v551
      %v593 = vunpack.c.l.b16 %v552
      %v594 = vunpack.c.l.b16 %v553
      %v595 = vunpack.c.l.b16 %v554
      %v596 = vunpack.c.l.b16 %v555
      %v597 = vunpack.c.l.b16 %v556
      %v598 = vunpack.c.l.b16 %v557
      %v599 = vunpack.c.l.b16 %v558
      %v600 = vunpack.c.l.b16 %v559
      %v601 = vunpack.c.l.b16 %v560
      %v602 = vunpack.c.l.b16 %v561
      %v603 = vunpack.c.l.b16 %v562
      %v604 = vunpack.c.l.b16 %v563
      %v605 = vpack.c.b16 %v590, %v589
      %v606 = vpack.c.b16 %v592, %v591
      %v607 = vpack.c.b16 %v594, %v593
      %v608 = vpack.c.b16 %v596, %v595
      %v609 = vpack.c.b16 %v598, %v597
      %v610 = vpack.c.b16 %v600, %v599
      %v611 = vpack.c.b16 %v602, %v601
      %v612 = vpack.c.b16 %v604, %v603
      %621 = vmatprep.subr.bf16.mxu0 0
      %622 = vmatpush1.bf16.msra.mxu0 %v612
      %623 = vmatprep.subr.bf16.mxu0 0
      %624 = vmatpush1.bf16.msra.mxu0 %v611
      %625 = vmatprep.subr.bf16.mxu0 0
      %626 = vmatpush1.bf16.msra.mxu0 %v610
      %627 = vmatprep.subr.bf16.mxu0 0
      %628 = vmatpush1.bf16.msra.mxu0 %v609
      %629 = vmatprep.subr.bf16.mxu0 0
      %630 = vmatpush1.bf16.msra.mxu0 %v608
      %631 = vmatprep.subr.bf16.mxu0 0
      %632 = vmatpush1.bf16.msra.mxu0 %v607
      %633 = vmatprep.subr.bf16.mxu0 0
      %634 = vmatpush1.bf16.msra.mxu0 %v606
      %635 = vmatprep.subr.bf16.mxu0 0
      %636 = vmatpush1.bf16.msra.mxu0 %v605
      %637 = vmatprep.subr.bf16.mxu0 0
      %638 = vmatpush2.bf16.msra.mxu0 0
      %639 = vmatprep.subr.bf16.mxu0 0
      %640 = vmatpush2.bf16.msra.mxu0 0
      %641 = vmatprep.subr.bf16.mxu0 0
      %642 = vmatpush2.bf16.msra.mxu0 0
      %643 = vmatprep.subr.bf16.mxu0 0
      %644 = vmatpush2.bf16.msra.mxu0 0
      %645 = vmatprep.subr.bf16.mxu0 0
      %646 = vmatpush2.bf16.msra.mxu0 0
      %647 = vmatprep.subr.bf16.mxu0 0
      %648 = vmatpush2.bf16.msra.mxu0 0
      %649 = vmatprep.subr.bf16.mxu0 0
      %650 = vmatpush2.bf16.msra.mxu0 0
      %651 = vmatprep.subr.bf16.mxu0 0
      %652 = vmatpush2.bf16.msra.mxu0 0
      %653 = vmatprep.mubr.bf16.mxu0 0
      %654 = vmatmul.mubr.bf16.gmra.mxu0 %v565
      %v655 = vpop.f32.mrf.mxu0
      %v656 = vadd.f32 %v571, %v655
      %v657 = vpop.f32.mrf.mxu0
      %v658 = vpop.f32.mrf.mxu0
      %v659 = vadd.f32 %v571, %v658
      %v660 = vpop.f32.mrf.mxu0
      %661 = vmatprep.mubr.bf16.mxu0 0
      %662 = vmatmul.mubr.bf16.gmra.mxu0 %v566
      %v663 = vpop.f32.mrf.mxu0
      %v664 = vadd.f32 %v571, %v663
      %v665 = vpop.f32.mrf.mxu0
      %v666 = vpop.f32.mrf.mxu0
      %v667 = vadd.f32 %v571, %v666
      %v668 = vpop.f32.mrf.mxu0
      %669 = vdwg.mxu0
      %v670 = vmax.f32 %v656, 0.0
      %v671 = vmax.f32 %v659, 0.0
      %v672 = vmax.f32 %v664, 0.0
      %v673 = vmax.f32 %v667, 0.0
      %v674 = vld [vmem:[%s5] sm:$0xf]
      %v675 = vld [vmem:[%s5 + $0x4] sm:$0xf]
      %v676 = vld [vmem:[%s5 + $0x8] sm:$0xf]
      %v677 = vld [vmem:[%s5 + $0xc] sm:$0xf]
      %v678 = vld [vmem:[%s5 + $0x10] sm:$0xf]
      %v679 = vld [vmem:[%s5 + $0x14] sm:$0xf]
      %v680 = vld [vmem:[%s5 + $0x18] sm:$0xf]
      %v681 = vld [vmem:[%s5 + $0x1c] sm:$0xf]
      %v682 = vld [vmem:[%s5 + $0x20] sm:$0xf]
      %v683 = vld [vmem:[%s5 + $0x24] sm:$0xf]
      %v684 = vld [vmem:[%s5 + $0x28] sm:$0xf]
      %v685 = vld [vmem:[%s5 + $0x2c] sm:$0xf]
      %v686 = vld [vmem:[%s5 + $0x30] sm:$0xf]
      %v687 = vld [vmem:[%s5 + $0x34] sm:$0xf]
      %v688 = vld [vmem:[%s5 + $0x38] sm:$0xf]
      %v689 = vld [vmem:[%s5 + $0x3c] sm:$0xf]
      %v690 = vld [vmem:[%s6] sm:$0x1]
      %v691 = vpack.c.bf16 %v671, %v670
      %v692 = vpack.c.bf16 %v673, %v672
      %v694 = vlaneseq
      %v695 = vshrl.u32 %v694, 7
      %v696 = vsub.s32 0, %v695
      %v697 = vrot.slane %v690, %v696
      %v715 = vunpack.c.l.b16 %v674
      %v716 = vunpack.c.l.b16 %v675
      %v717 = vunpack.c.l.b16 %v676
      %v718 = vunpack.c.l.b16 %v677
      %v719 = vunpack.c.l.b16 %v678
      %v720 = vunpack.c.l.b16 %v679
      %v721 = vunpack.c.l.b16 %v680
      %v722 = vunpack.c.l.b16 %v681
      %v723 = vunpack.c.l.b16 %v682
      %v724 = vunpack.c.l.b16 %v683
      %v725 = vunpack.c.l.b16 %v684
      %v726 = vunpack.c.l.b16 %v685
      %v727 = vunpack.c.l.b16 %v686
      %v728 = vunpack.c.l.b16 %v687
      %v729 = vunpack.c.l.b16 %v688
      %v730 = vunpack.c.l.b16 %v689
      %v731 = vpack.c.b16 %v716, %v715
      %v732 = vpack.c.b16 %v718, %v717
      %v733 = vpack.c.b16 %v720, %v719
      %v734 = vpack.c.b16 %v722, %v721
      %v735 = vpack.c.b16 %v724, %v723
      %v736 = vpack.c.b16 %v726, %v725
      %v737 = vpack.c.b16 %v728, %v727
      %v738 = vpack.c.b16 %v730, %v729
      %747 = vmatprep.subr.bf16.mxu0 0
      %748 = vmatpush1.bf16.msra.mxu0 %v738
      %749 = vmatprep.subr.bf16.mxu0 0
      %750 = vmatpush1.bf16.msra.mxu0 %v737
      %751 = vmatprep.subr.bf16.mxu0 0
      %752 = vmatpush1.bf16.msra.mxu0 %v736
      %753 = vmatprep.subr.bf16.mxu0 0
      %754 = vmatpush1.bf16.msra.mxu0 %v735
      %755 = vmatprep.subr.bf16.mxu0 0
      %756 = vmatpush1.bf16.msra.mxu0 %v734
      %757 = vmatprep.subr.bf16.mxu0 0
      %758 = vmatpush1.bf16.msra.mxu0 %v733
      %759 = vmatprep.subr.bf16.mxu0 0
      %760 = vmatpush1.bf16.msra.mxu0 %v732
      %761 = vmatprep.subr.bf16.mxu0 0
      %762 = vmatpush1.bf16.msra.mxu0 %v731
      %763 = vmatprep.subr.bf16.mxu0 0
      %764 = vmatpush2.bf16.msra.mxu0 0
      %765 = vmatprep.subr.bf16.mxu0 0
      %766 = vmatpush2.bf16.msra.mxu0 0
      %767 = vmatprep.subr.bf16.mxu0 0
      %768 = vmatpush2.bf16.msra.mxu0 0
      %769 = vmatprep.subr.bf16.mxu0 0
      %770 = vmatpush2.bf16.msra.mxu0 0
      %771 = vmatprep.subr.bf16.mxu0 0
      %772 = vmatpush2.bf16.msra.mxu0 0
      %773 = vmatprep.subr.bf16.mxu0 0
      %774 = vmatpush2.bf16.msra.mxu0 0
      %775 = vmatprep.subr.bf16.mxu0 0
      %776 = vmatpush2.bf16.msra.mxu0 0
      %777 = vmatprep.subr.bf16.mxu0 0
      %778 = vmatpush2.bf16.msra.mxu0 0
      %779 = vmatprep.mubr.bf16.mxu0 0
      %780 = vmatmul.mubr.bf16.gmra.mxu0 %v691
      %v781 = vpop.f32.mrf.mxu0
      %v782 = vadd.f32 %v697, %v781
      %v783 = vpop.f32.mrf.mxu0
      %v784 = vpop.f32.mrf.mxu0
      %v785 = vadd.f32 %v697, %v784
      %v786 = vpop.f32.mrf.mxu0
      %787 = vmatprep.mubr.bf16.mxu0 0
      %788 = vmatmul.mubr.bf16.gmra.mxu0 %v692
      %v789 = vpop.f32.mrf.mxu0
      %v790 = vadd.f32 %v697, %v789
      %v791 = vpop.f32.mrf.mxu0
      %v792 = vpop.f32.mrf.mxu0
      %v793 = vadd.f32 %v697, %v792
      %v794 = vpop.f32.mrf.mxu0
      %795 = vdwg.mxu0
      %v796 = vmax.f32 %v782, 0.0
      %v797 = vmax.f32 %v785, 0.0
      %v798 = vmax.f32 %v790, 0.0
      %v799 = vmax.f32 %v793, 0.0
      %v800 = vld [vmem:[%s7] sm:$0xf]
      %v801 = vld [vmem:[%s7 + $0x4] sm:$0xf]
      %v802 = vld [vmem:[%s7 + $0x8] sm:$0xf]
      %v803 = vld [vmem:[%s7 + $0xc] sm:$0xf]
      %v804 = vld [vmem:[%s7 + $0x10] sm:$0xf]
      %v805 = vld [vmem:[%s7 + $0x14] sm:$0xf]
      %v806 = vld [vmem:[%s7 + $0x18] sm:$0xf]
      %v807 = vld [vmem:[%s7 + $0x1c] sm:$0xf]
      %v808 = vld [vmem:[%s7 + $0x20] sm:$0xf]
      %v809 = vld [vmem:[%s7 + $0x24] sm:$0xf]
      %v810 = vld [vmem:[%s7 + $0x28] sm:$0xf]
      %v811 = vld [vmem:[%s7 + $0x2c] sm:$0xf]
      %v812 = vld [vmem:[%s7 + $0x30] sm:$0xf]
      %v813 = vld [vmem:[%s7 + $0x34] sm:$0xf]
      %v814 = vld [vmem:[%s7 + $0x38] sm:$0xf]
      %v815 = vld [vmem:[%s7 + $0x3c] sm:$0xf]
      %v816 = vld [vmem:[%s8] sm:$0xf]
      %v817 = vld [vmem:[%s8 + $0x4] sm:$0xf]
      %v818 = vld [vmem:[%s8 + $0x8] sm:$0xf]
      %v819 = vld [vmem:[%s8 + $0xc] sm:$0xf]
      %v820 = vld [vmem:[%s8 + $0x10] sm:$0xf]
      %v821 = vld [vmem:[%s8 + $0x14] sm:$0xf]
      %v822 = vld [vmem:[%s8 + $0x18] sm:$0xf]
      %v823 = vld [vmem:[%s8 + $0x1c] sm:$0xf]
      %v824 = vld [vmem:[%s8 + $0x20] sm:$0xf]
      %v825 = vld [vmem:[%s8 + $0x24] sm:$0xf]
      %v826 = vld [vmem:[%s8 + $0x28] sm:$0xf]
      %v827 = vld [vmem:[%s8 + $0x2c] sm:$0xf]
      %v828 = vld [vmem:[%s8 + $0x30] sm:$0xf]
      %v829 = vld [vmem:[%s8 + $0x34] sm:$0xf]
      %v830 = vld [vmem:[%s8 + $0x38] sm:$0xf]
      %v831 = vld [vmem:[%s8 + $0x3c] sm:$0xf]
      %v832 = vld [vmem:[%s9] sm:$0x1]
      %v833 = vld [vmem:[%s10] sm:$0xf]
      %v834 = vld [vmem:[%s10 + $0x4] sm:$0xf]
      %v835 = vld [vmem:[%s10 + $0x8] sm:$0xf]
      %v836 = vld [vmem:[%s10 + $0xc] sm:$0xf]
      %v837 = vld [vmem:[%s10 + $0x10] sm:$0xf]
      %v838 = vld [vmem:[%s10 + $0x14] sm:$0xf]
      %v839 = vld [vmem:[%s10 + $0x18] sm:$0xf]
      %v840 = vld [vmem:[%s10 + $0x1c] sm:$0xf]
      %v841 = vld [vmem:[%s10 + $0x20] sm:$0xf]
      %v842 = vld [vmem:[%s10 + $0x24] sm:$0xf]
      %v843 = vld [vmem:[%s10 + $0x28] sm:$0xf]
      %v844 = vld [vmem:[%s10 + $0x2c] sm:$0xf]
      %v845 = vld [vmem:[%s10 + $0x30] sm:$0xf]
      %v846 = vld [vmem:[%s10 + $0x34] sm:$0xf]
      %v847 = vld [vmem:[%s10 + $0x38] sm:$0xf]
      %v848 = vld [vmem:[%s10 + $0x3c] sm:$0xf]
      %v849 = vld [vmem:[%s11] sm:$0x1]
      %v850 = vpack.c.bf16 %v797, %v796
      %v851 = vpack.c.bf16 %v799, %v798
      %v868 = vunpack.c.l.b16 %v800
      %v869 = vunpack.c.l.b16 %v801
      %v870 = vunpack.c.l.b16 %v802
      %v871 = vunpack.c.l.b16 %v803
      %v872 = vunpack.c.l.b16 %v804
      %v873 = vunpack.c.l.b16 %v805
      %v874 = vunpack.c.l.b16 %v806
      %v875 = vunpack.c.l.b16 %v807
      %v876 = vunpack.c.l.b16 %v808
      %v877 = vunpack.c.l.b16 %v809
      %v878 = vunpack.c.l.b16 %v810
      %v879 = vunpack.c.l.b16 %v811
      %v880 = vunpack.c.l.b16 %v812
      %v881 = vunpack.c.l.b16 %v813
      %v882 = vunpack.c.l.b16 %v814
      %v883 = vunpack.c.l.b16 %v815
      %v884 = vpack.c.b16 %v869, %v868
      %v885 = vpack.c.b16 %v871, %v870
      %v886 = vpack.c.b16 %v873, %v872
      %v887 = vpack.c.b16 %v875, %v874
      %v888 = vpack.c.b16 %v877, %v876
      %v889 = vpack.c.b16 %v879, %v878
      %v890 = vpack.c.b16 %v881, %v880
      %v891 = vpack.c.b16 %v883, %v882
      %900 = vmatprep.subr.bf16.mxu0 0
      %901 = vmatpush1.bf16.msra.mxu0 %v891
      %902 = vmatprep.subr.bf16.mxu0 0
      %903 = vmatpush1.bf16.msra.mxu0 %v890
      %904 = vmatprep.subr.bf16.mxu0 0
      %905 = vmatpush1.bf16.msra.mxu0 %v889
      %906 = vmatprep.subr.bf16.mxu0 0
      %907 = vmatpush1.bf16.msra.mxu0 %v888
      %908 = vmatprep.subr.bf16.mxu0 0
      %909 = vmatpush1.bf16.msra.mxu0 %v887
      %910 = vmatprep.subr.bf16.mxu0 0
      %911 = vmatpush1.bf16.msra.mxu0 %v886
      %912 = vmatprep.subr.bf16.mxu0 0
      %913 = vmatpush1.bf16.msra.mxu0 %v885
      %914 = vmatprep.subr.bf16.mxu0 0
      %915 = vmatpush1.bf16.msra.mxu0 %v884
      %916 = vmatprep.subr.bf16.mxu0 0
      %917 = vmatpush2.bf16.msra.mxu0 0
      %918 = vmatprep.subr.bf16.mxu0 0
      %919 = vmatpush2.bf16.msra.mxu0 0
      %920 = vmatprep.subr.bf16.mxu0 0
      %921 = vmatpush2.bf16.msra.mxu0 0
      %922 = vmatprep.subr.bf16.mxu0 0
      %923 = vmatpush2.bf16.msra.mxu0 0
      %924 = vmatprep.subr.bf16.mxu0 0
      %925 = vmatpush2.bf16.msra.mxu0 0
      %926 = vmatprep.subr.bf16.mxu0 0
      %927 = vmatpush2.bf16.msra.mxu0 0
      %928 = vmatprep.subr.bf16.mxu0 0
      %929 = vmatpush2.bf16.msra.mxu0 0
      %930 = vmatprep.subr.bf16.mxu0 0
      %931 = vmatpush2.bf16.msra.mxu0 0
      %932 = vmatprep.mubr.bf16.mxu0 0
      %933 = vmatmul.mubr.bf16.gmra.mxu0 %v850
      %v934 = vpop.f32.mrf.mxu0
      %v935 = vadd.f32 0.0, %v934
      %v936 = vpop.f32.mrf.mxu0
      %v937 = vpop.f32.mrf.mxu0
      %v938 = vadd.f32 0.0, %v937
      %v939 = vpop.f32.mrf.mxu0
      %940 = vmatprep.mubr.bf16.mxu0 0
      %941 = vmatmul.mubr.bf16.gmra.mxu0 %v851
      %v942 = vpop.f32.mrf.mxu0
      %v943 = vadd.f32 0.0, %v942
      %v944 = vpop.f32.mrf.mxu0
      %v945 = vpop.f32.mrf.mxu0
      %v946 = vadd.f32 0.0, %v945
      %v947 = vpop.f32.mrf.mxu0
      %948 = vdwg.mxu0
      %v949 = vmax.f32 %v935, 0.0
      %v950 = vmax.f32 %v938, 0.0
      %v951 = vmax.f32 %v943, 0.0
      %v952 = vmax.f32 %v946, 0.0
      %v953 = vpack.c.bf16 %v950, %v949
      %v954 = vpack.c.bf16 %v952, %v951
      %v956 = vlaneseq
      %v957 = vshrl.u32 %v956, 7
      %v958 = vsub.s32 0, %v957
      %v959 = vrot.slane %v832, %v958
      %v977 = vunpack.c.l.b16 %v816
      %v978 = vunpack.c.l.b16 %v817
      %v979 = vunpack.c.l.b16 %v818
      %v980 = vunpack.c.l.b16 %v819
      %v981 = vunpack.c.l.b16 %v820
      %v982 = vunpack.c.l.b16 %v821
      %v983 = vunpack.c.l.b16 %v822
      %v984 = vunpack.c.l.b16 %v823
      %v985 = vunpack.c.l.b16 %v824
      %v986 = vunpack.c.l.b16 %v825
      %v987 = vunpack.c.l.b16 %v826
      %v988 = vunpack.c.l.b16 %v827
      %v989 = vunpack.c.l.b16 %v828
      %v990 = vunpack.c.l.b16 %v829
      %v991 = vunpack.c.l.b16 %v830
      %v992 = vunpack.c.l.b16 %v831
      %v993 = vpack.c.b16 %v978, %v977
      %v994 = vpack.c.b16 %v980, %v979
      %v995 = vpack.c.b16 %v982, %v981
      %v996 = vpack.c.b16 %v984, %v983
      %v997 = vpack.c.b16 %v986, %v985
      %v998 = vpack.c.b16 %v988, %v987
      %v999 = vpack.c.b16 %v990, %v989
      %v1000 = vpack.c.b16 %v992, %v991
      %1009 = vmatprep.subr.bf16.mxu0 0
      %1010 = vmatpush1.bf16.msra.mxu0 %v1000
      %1011 = vmatprep.subr.bf16.mxu0 0
      %1012 = vmatpush1.bf16.msra.mxu0 %v999
      %1013 = vmatprep.subr.bf16.mxu0 0
      %1014 = vmatpush1.bf16.msra.mxu0 %v998
      %1015 = vmatprep.subr.bf16.mxu0 0
      %1016 = vmatpush1.bf16.msra.mxu0 %v997
      %1017 = vmatprep.subr.bf16.mxu0 0
      %1018 = vmatpush1.bf16.msra.mxu0 %v996
      %1019 = vmatprep.subr.bf16.mxu0 0
      %1020 = vmatpush1.bf16.msra.mxu0 %v995
      %1021 = vmatprep.subr.bf16.mxu0 0
      %1022 = vmatpush1.bf16.msra.mxu0 %v994
      %1023 = vmatprep.subr.bf16.mxu0 0
      %1024 = vmatpush1.bf16.msra.mxu0 %v993
      %1025 = vmatprep.subr.bf16.mxu0 0
      %1026 = vmatpush2.bf16.msra.mxu0 0
      %1027 = vmatprep.subr.bf16.mxu0 0
      %1028 = vmatpush2.bf16.msra.mxu0 0
      %1029 = vmatprep.subr.bf16.mxu0 0
      %1030 = vmatpush2.bf16.msra.mxu0 0
      %1031 = vmatprep.subr.bf16.mxu0 0
      %1032 = vmatpush2.bf16.msra.mxu0 0
      %1033 = vmatprep.subr.bf16.mxu0 0
      %1034 = vmatpush2.bf16.msra.mxu0 0
      %1035 = vmatprep.subr.bf16.mxu0 0
      %1036 = vmatpush2.bf16.msra.mxu0 0
      %1037 = vmatprep.subr.bf16.mxu0 0
      %1038 = vmatpush2.bf16.msra.mxu0 0
      %1039 = vmatprep.subr.bf16.mxu0 0
      %1040 = vmatpush2.bf16.msra.mxu0 0
      %1041 = vmatprep.mubr.bf16.mxu0 0
      %1042 = vmatmul.mubr.bf16.gmra.mxu0 %v953
      %v1043 = vpop.f32.mrf.mxu0
      %v1044 = vadd.f32 %v959, %v1043
      %v1045 = vpop.f32.mrf.mxu0
      %v1046 = vpop.f32.mrf.mxu0
      %v1047 = vadd.f32 %v959, %v1046
      %v1048 = vpop.f32.mrf.mxu0
      %1049 = vmatprep.mubr.bf16.mxu0 0
      %1050 = vmatmul.mubr.bf16.gmra.mxu0 %v954
      %v1051 = vpop.f32.mrf.mxu0
      %v1052 = vadd.f32 %v959, %v1051
      %v1053 = vpop.f32.mrf.mxu0
      %v1054 = vpop.f32.mrf.mxu0
      %v1055 = vadd.f32 %v959, %v1054
      %v1056 = vpop.f32.mrf.mxu0
      %1057 = vdwg.mxu0
      %1058 = vst.msk [vmem:[%s450] sm:$0xff] %vm488, %v1044
      %1059 = vst.msk [vmem:[%s450 + $0x8] sm:$0xff] %vm488, %v1047
      %1060 = vst.msk [vmem:[%s450 + $0x10] sm:$0xff] %vm488, %v1052
      %1061 = vst.msk [vmem:[%s450 + $0x18] sm:$0xff] %vm488, %v1055
      %v1063 = vlaneseq
      %v1064 = vshrl.u32 %v1063, 7
      %v1065 = vsub.s32 0, %v1064
      %v1066 = vrot.slane %v849, %v1065
      %v1084 = vunpack.c.l.b16 %v833
      %v1085 = vunpack.c.l.b16 %v834
      %v1086 = vunpack.c.l.b16 %v835
      %v1087 = vunpack.c.l.b16 %v836
      %v1088 = vunpack.c.l.b16 %v837
      %v1089 = vunpack.c.l.b16 %v838
      %v1090 = vunpack.c.l.b16 %v839
      %v1091 = vunpack.c.l.b16 %v840
      %v1092 = vunpack.c.l.b16 %v841
      %v1093 = vunpack.c.l.b16 %v842
      %v1094 = vunpack.c.l.b16 %v843
      %v1095 = vunpack.c.l.b16 %v844
      %v1096 = vunpack.c.l.b16 %v845
      %v1097 = vunpack.c.l.b16 %v846
      %v1098 = vunpack.c.l.b16 %v847
      %v1099 = vunpack.c.l.b16 %v848
      %v1100 = vpack.c.b16 %v1085, %v1084
      %v1101 = vpack.c.b16 %v1087, %v1086
      %v1102 = vpack.c.b16 %v1089, %v1088
      %v1103 = vpack.c.b16 %v1091, %v1090
      %v1104 = vpack.c.b16 %v1093, %v1092
      %v1105 = vpack.c.b16 %v1095, %v1094
      %v1106 = vpack.c.b16 %v1097, %v1096
      %v1107 = vpack.c.b16 %v1099, %v1098
      %1116 = vmatprep.subr.bf16.mxu0 0
      %1117 = vmatpush1.bf16.msra.mxu0 %v1107
      %1118 = vmatprep.subr.bf16.mxu0 0
      %1119 = vmatpush1.bf16.msra.mxu0 %v1106
      %1120 = vmatprep.subr.bf16.mxu0 0
      %1121 = vmatpush1.bf16.msra.mxu0 %v1105
      %1122 = vmatprep.subr.bf16.mxu0 0
      %1123 = vmatpush1.bf16.msra.mxu0 %v1104
      %1124 = vmatprep.subr.bf16.mxu0 0
      %1125 = vmatpush1.bf16.msra.mxu0 %v1103
      %1126 = vmatprep.subr.bf16.mxu0 0
      %1127 = vmatpush1.bf16.msra.mxu0 %v1102
      %1128 = vmatprep.subr.bf16.mxu0 0
      %1129 = vmatpush1.bf16.msra.mxu0 %v1101
      %1130 = vmatprep.subr.bf16.mxu0 0
      %1131 = vmatpush1.bf16.msra.mxu0 %v1100
      %1132 = vmatprep.subr.bf16.mxu0 0
      %1133 = vmatpush2.bf16.msra.mxu0 0
      %1134 = vmatprep.subr.bf16.mxu0 0
      %1135 = vmatpush2.bf16.msra.mxu0 0
      %1136 = vmatprep.subr.bf16.mxu0 0
      %1137 = vmatpush2.bf16.msra.mxu0 0
      %1138 = vmatprep.subr.bf16.mxu0 0
      %1139 = vmatpush2.bf16.msra.mxu0 0
      %1140 = vmatprep.subr.bf16.mxu0 0
      %1141 = vmatpush2.bf16.msra.mxu0 0
      %1142 = vmatprep.subr.bf16.mxu0 0
      %1143 = vmatpush2.bf16.msra.mxu0 0
      %1144 = vmatprep.subr.bf16.mxu0 0
      %1145 = vmatpush2.bf16.msra.mxu0 0
      %1146 = vmatprep.subr.bf16.mxu0 0
      %1147 = vmatpush2.bf16.msra.mxu0 0
      %1148 = vmatprep.mubr.bf16.mxu0 0
      %1149 = vmatmul.mubr.bf16.gmra.mxu0 %v953
      %v1150 = vpop.f32.mrf.mxu0
      %v1151 = vadd.f32 %v1066, %v1150
      %v1152 = vpop.f32.mrf.mxu0
      %v1153 = vpop.f32.mrf.mxu0
      %v1154 = vadd.f32 %v1066, %v1153
      %v1155 = vpop.f32.mrf.mxu0
      %1156 = vmatprep.mubr.bf16.mxu0 0
      %1157 = vmatmul.mubr.bf16.gmra.mxu0 %v954
      %v1158 = vpop.f32.mrf.mxu0
      %v1159 = vadd.f32 %v1066, %v1158
      %v1160 = vpop.f32.mrf.mxu0
      %v1161 = vpop.f32.mrf.mxu0
      %v1162 = vadd.f32 %v1066, %v1161
      %v1163 = vpop.f32.mrf.mxu0
      %1164 = vdwg.mxu0
      %vm1165 = vcmask 64512
      %1166 = vst.msk [vmem:[%s456] sm:$0xff] %vm1165, %v1151
      %1167 = vst.msk [vmem:[%s456 + $0x8] sm:$0xff] %vm1165, %v1154
      %1168 = vst.msk [vmem:[%s456 + $0x10] sm:$0xff] %vm1165, %v1159
      %1169 = vst.msk [vmem:[%s456 + $0x18] sm:$0xff] %vm1165, %v1162
      %s1170 = smul.u32 4, %s25
      %p1171 = scmp.lt.s32.totalorder %s1170, 7
      %s1172 = scalar_select %p1171, %s1170, 7
      %s1173 = smul.addr %s1172, 8
      %s1174 = scalar_lea.vmem %s12, %s1173
      %s1175 = smul.u32 4, %s25
      %p1176 = scmp.lt.s32.totalorder %s1175, 7
      %s1177 = scalar_select %p1176, %s1175, 7
      %s1178 = smul.addr %s1177, 8
      %s1179 = scalar_lea.vmem %s13, %s1178
      // Predicated region
      $region69: #{nbeats_generic_block.1} parent=67 // pred_check
        %p1180 = pneg %p300
      $region70: #{nbeats_generic_block.1} parent=67 // pred_check_branch
        %1182 = sbr.rel (%p1180) target = $region72
      $region71: #{nbeats_generic_block.1} parent=67 // pred_region
        %s1183 = smul.u32 4, %s25
      $region72: #{nbeats_generic_block.1} parent=67 // pred_fallthru
        _
      // Predicated region
      $region73: #{nbeats_generic_block.1} parent=67 // pred_check
        %p1184 = pneg %p326
      $region74: #{nbeats_generic_block.1} parent=67 // pred_check_branch
        %1186 = sbr.rel (%p1184) target = $region76
      $region75: #{nbeats_generic_block.1} parent=67 // pred_region
        %s1187 = smul.u32 4, %s25
      $region76: #{nbeats_generic_block.1} parent=67 // pred_fallthru
        _
    $region68: #{nbeats_generic_block.1} parent=5 // pred_fallthru
      _
    %p1188 = scmp.le.s32.totalorder 2, %s20
    // Predicated region
    $region77: #{nbeats_generic_block.1} parent=5 // pred_check
      %p1189 = pneg %p1188
    $region78: #{nbeats_generic_block.1} parent=5 // pred_check_branch
      %1191 = sbr.rel (%p1189) target = $region80
    $region79: #{nbeats_generic_block.1} parent=5 // pred_region
      %s1192 = ssub.s32 %s20, 2
      // Predicated region
      $region81: #{nbeats_generic_block.1} parent=79 // pred_check
        %p1193 = pneg %p306
      $region82: #{nbeats_generic_block.1} parent=79 // pred_check_branch
        %1195 = sbr.rel (%p1193) target = $region84
      $region83: #{nbeats_generic_block.1} parent=79 // pred_region
        %s1196 = smul.u32 4, %s26
        %p1197 = scmp.lt.s32.totalorder %s1196, 7
        %s1198 = scalar_select %p1197, %s1196, 7
        %s1199 = smul.addr %s1198, 8
        %s1200 = scalar_lea.vmem %s12, %s1199
      $region84: #{nbeats_generic_block.1} parent=79 // pred_fallthru
        _
      // Predicated region
      $region85: #{nbeats_generic_block.1} parent=79 // pred_check
        %p1201 = pneg %p332
      $region86: #{nbeats_generic_block.1} parent=79 // pred_check_branch
        %1203 = sbr.rel (%p1201) target = $region88
      $region87: #{nbeats_generic_block.1} parent=79 // pred_region
        %s1204 = smul.u32 4, %s26
        %p1205 = scmp.lt.s32.totalorder %s1204, 7
        %s1206 = scalar_select %p1205, %s1204, 7
        %s1207 = smul.addr %s1206, 8
        %s1208 = scalar_lea.vmem %s13, %s1207
      $region88: #{nbeats_generic_block.1} parent=79 // pred_fallthru
        _
    $region80: #{nbeats_generic_block.1} parent=5 // pred_fallthru
      _
  $region6: #{nbeats_generic_block.1} parent=0 // loop_footer
    %s24 = sadd.s32 1, %s20
  $region7: #{nbeats_generic_block.1} parent=0 // loop_footer_branch
    %19 = sbr.rel target = $region3
  $region8: #{nbeats_generic_block.1} parent=0 // loop_exit
    _

</llo_original>
